<compile_context>
chip_gen: v6e
topology: v6e:2x2x1
jax: 0.10.0
libtpu: 0.0.40
codegen_flags: <defaults>
</compile_context>

<pallas_src>
import jax
import jax.numpy as jnp
from jax.experimental import pallas as pl
from jax.experimental.pallas import tpu as pltpu


_TARGET_BLOCK_BYTES = 4 * 1024 * 1024    # ~4 MiB per VMEM buffer (in and out)
_SPLIT_THRESHOLD_BYTES = 512 * 1024      # force >= ~4 grid steps above this
_VMEM_LIMIT_BYTES = 48 * 1024 * 1024     # safe on v5e/v6e (128 MiB) & v7x (64 MiB)


def _c_sigmoid_kernel(x_ref, o_ref):
    x = x_ref[...]
    # bf16 stays bf16 (v6e/v7x have bf16 VPU/EUP); everything else computes f32.
    if x.dtype in (jnp.float32, jnp.bfloat16):
        xc = x
    else:
        xc = x.astype(jnp.float32)
    # Numerically stable sigmoid:
    #   x >= 0: 1 / (1 + exp(-x));   x < 0: exp(x) / (1 + exp(x))
    # exp goes to the EUP (its own VLIW slot); the remaining VPU ops are hidden
    # under the HBM stream.
    z = jnp.exp(-jnp.abs(xc))
    num = jnp.where(xc >= 0, 1.0, z)
    o_ref[...] = (num / (1.0 + z)).astype(o_ref.dtype)


def _sigmoid_pallas_flat(flat: jax.Array) -> jax.Array:
    """Elementwise sigmoid on a flat (1-D) real array via one pallas_call."""
    n = flat.shape[0]
    if n == 0:
        return flat

    itemsize = jnp.dtype(flat.dtype).itemsize
    # Sublane multiple for the dtype packing (f32 -> 8, bf16/f16 -> 16, int8 -> 32).
    sub = 8 * max(1, 4 // itemsize)

    # Widest lane dim (multiple of 128) that divides n -> unmasked full-width stores.
    lanes = 0
    for cand in (1024, 512, 256, 128):
        if n % cand == 0:
            lanes = cand
            break
    if lanes == 0:
        # TODO(synk): replace this minimal pad + slice with an in-kernel masked
        # tail store (scalar-prefetched n) to avoid the whole-array copies.
        pad = (-n) % 128
        return _sigmoid_pallas_flat(jnp.pad(flat, (0, pad)))[:n]

    rows = n // lanes

    # ~4 MiB per buffer, rounded to a whole number of sublane groups.
    target_rows = max(sub, (_TARGET_BLOCK_BYTES // (lanes * itemsize)) // sub * sub)

    if n * itemsize >= _SPLIT_THRESHOLD_BYTES:
        # Guarantee >= ~4 grid steps: v7x megacore sharding + DMA/compute overlap.
        cap = max(sub, (pl.cdiv(rows, 4) // sub) * sub)
        tile_rows = min(target_rows, cap)
    else:
        # Small input: single full-extent block (block dim == array dim is always
        # a legal block shape), one grid step, no per-step overhead.
        tile_rows = min(target_rows, rows)

    grid = (pl.cdiv(rows, tile_rows),)   # partial last block handled by Pallas
    x2d = flat.reshape(rows, lanes)

    out2d = pl.pallas_call(
        _c_sigmoid_kernel,
        out_shape=jax.ShapeDtypeStruct((rows, lanes), flat.dtype),
        grid=grid,
        in_specs=[pl.BlockSpec((tile_rows, lanes), lambda i: (i, 0))],
        out_specs=pl.BlockSpec((tile_rows, lanes), lambda i: (i, 0)),
        compiler_params=pltpu.CompilerParams(
            dimension_semantics=("parallel",),
            vmem_limit_bytes=_VMEM_LIMIT_BYTES,
        ),
    )(x2d)
    return out2d.reshape(-1)


def c_sigmoid(x: jax.Array) -> jax.Array:
    """CSigmoid forward: elementwise sigmoid (split over real/imag if complex)."""
    if jnp.iscomplexobj(x):
        if x.dtype == jnp.complex64:
            # Single-pass path: float32 bitcast view of the interleaved (re, im)
            # buffer -> one kernel -> bitcast back. Split-sigmoid is elementwise
            # on both components, so this is semantically identical.
            try:
                xf = jax.lax.bitcast_convert_type(x, jnp.float32)  # shape + (2,)
            except Exception:
                xf = None
            if xf is not None:
                return jax.lax.bitcast_convert_type(c_sigmoid(xf), jnp.complex64)
        # TODO(synk): complex128 has no float64 Pallas path on TPU; fall back to
        # a real/imag split (two kernel launches).
        return jax.lax.complex(c_sigmoid(jnp.real(x)), c_sigmoid(jnp.imag(x)))

    orig_shape = x.shape
    out = _sigmoid_pallas_flat(x.reshape(-1))
    return out.reshape(orig_shape)


if __name__ == "__main__":
    key = jax.random.PRNGKey(0)
    k_real, k_re, k_im = jax.random.split(key, 3)

    # Real NCHW input, matching the PyTorch convention.
    x = jax.random.normal(k_real, (2, 4, 16, 16), dtype=jnp.float32) * 3.0
    out = jax.block_until_ready(c_sigmoid(x))
    ref = jax.nn.sigmoid(x)
    assert out.shape == x.shape and out.dtype == x.dtype
    assert jnp.allclose(out, ref, atol=1e-5, rtol=1e-5), "real mismatch vs sigmoid"

    # Complex input (split-sigmoid convention).
    xc = jax.lax.complex(
        jax.random.normal(k_re, (2, 4, 16, 16), jnp.float32),
        jax.random.normal(k_im, (2, 4, 16, 16), jnp.float32),
    ) * 3.0
    outc = jax.block_until_ready(c_sigmoid(xc))
    refc = jax.lax.complex(jax.nn.sigmoid(jnp.real(xc)), jax.nn.sigmoid(jnp.imag(xc)))
    assert outc.shape == xc.shape and outc.dtype == xc.dtype
    assert jnp.allclose(outc, refc, atol=1e-5, rtol=1e-5), "complex mismatch"

    # Ragged size (not a multiple of 128) exercises the padded fallback path.
    xr = jax.random.normal(k_real, (3, 5, 7), dtype=jnp.float32) * 3.0
    outr = jax.block_until_ready(c_sigmoid(xr))
    assert jnp.allclose(outr, jax.nn.sigmoid(xr), atol=1e-5, rtol=1e-5), "ragged mismatch"

    print("KERNEL_OK")
</pallas_src>

<mosaic_0001>
module attributes {stable_mosaic.version = 11 : i64} {
  func.func @_c_sigmoid_kernel(%arg0: i32, %arg1: memref<2x1024xf32, #tpu.memory_space<vmem>>, %arg2: memref<2x1024xf32, #tpu.memory_space<vmem>>) attributes {dimension_semantics = [#tpu.dimension_semantics<parallel>], iteration_bounds = array<i64: 1>, scalar_prefetch = 0 : i64, scratch_operands = 0 : i64, tpu.core_type = #tpu.core_type<tc>, window_params = [{transform_indices = @transform_0, window_bounds = array<i64: 2, 1024>}, {transform_indices = @transform_1, window_bounds = array<i64: 2, 1024>}]} {
    %c0 = arith.constant 0 : index
    %c0_0 = arith.constant 0 : index
    %0 = vector.load %arg1[%c0, %c0_0] : memref<2x1024xf32, #tpu.memory_space<vmem>>, vector<2x1024xf32>
    %1 = math.absf %0 : vector<2x1024xf32>
    %cst = arith.constant 0.000000e+00 : f32
    %2 = vector.broadcast %cst : f32 to vector<2x1024xf32>
    %3 = arith.subf %2, %1 : vector<2x1024xf32>
    %4 = math.exp %3 : vector<2x1024xf32>
    %cst_1 = arith.constant 0.000000e+00 : f32
    %5 = vector.broadcast %cst_1 : f32 to vector<2x1024xf32>
    %6 = arith.cmpf oge, %0, %5 : vector<2x1024xf32>
    %cst_2 = arith.constant 1.000000e+00 : f32
    %7 = vector.broadcast %cst_2 : f32 to vector<2x1024xf32>
    %8 = arith.select %6, %7, %4 : vector<2x1024xi1>, vector<2x1024xf32>
    %cst_3 = arith.constant 1.000000e+00 : f32
    %9 = vector.broadcast %cst_3 : f32 to vector<2x1024xf32>
    %10 = arith.addf %9, %4 : vector<2x1024xf32>
    %11 = arith.divf %8, %10 : vector<2x1024xf32>
    %c0_4 = arith.constant 0 : index
    %c0_5 = arith.constant 0 : index
    %12 = vector.load %arg2[%c0_4, %c0_5] : memref<2x1024xf32, #tpu.memory_space<vmem>>, vector<2x1024xf32>
    tpu.vector_store %arg2[%c0_4, %c0_5], %11 {strides = array<i32>} : memref<2x1024xf32, #tpu.memory_space<vmem>>, vector<2x1024xf32>,
    return
  }
  func.func @transform_0(%arg0: i32) -> (i32, i32) {
    %c0_i32 = arith.constant 0 : i32
    %c0_i32_0 = arith.constant 0 : i32
    return %arg0, %c0_i32 : i32, i32
  }
  func.func @transform_1(%arg0: i32) -> (i32, i32) {
    %c0_i32 = arith.constant 0 : i32
    %c0_i32_0 = arith.constant 0 : i32
    return %arg0, %c0_i32 : i32, i32
  }
}

</mosaic_0001>

<llo_original>
// kernel: tpu_custom_call.1
$region0: #{tpu_custom_call.1}
  #allocation0 [shape = 'u32[]', space=smem, size = 0x4, offset = 0x4, fixed_abs, tag = 'smem constant byte address 0x4 - core index']
  #allocation1 [shape = 'u32[144,128]{1,0:T(1,128)}', space=vmem, size = 0x12000, scoped, tag = 'internal scratch']
  %s0 = inlined_call_operand.hbm [shape: f32[2,1024], index: 0, kind: input, shape index: {}]
  %s1 = inlined_call_operand.hbm [shape: f32[2,1024], index: 1, kind: output, shape index: {}]
  %s2 = sld [smem:[#allocation0]]
  $region18: #{tpu_custom_call.1} parent=0
    _
  %s4 = ssub.s32 1, %s2
  %s5 = scalar_select 0, %s4, %s2
  $region1: #{tpu_custom_call.1} parent=0
    #allocation2 [shape = 'u8[8192]{0}', space=vmem, size = 0x2000, scoped, tag = 'input window, operand 0, single buffered']
    #allocation3 [shape = 's32[1]{0}', space=sflag, size = 0x4, scoped, tag = 'scoped memory for tpu_custom_call.1']
    #allocation4 [shape = 's32[1]{0}', space=sflag, size = 0x4, scoped, tag = 'scoped memory for tpu_custom_call.1']
    #allocation5 [shape = 'u8[8192]{0}', space=vmem, size = 0x2000, scoped, tag = 'output window, operand 0, single buffered']
    %6 = vsyncpa [#allocation3], 0
    %7 = vsyncpa [#allocation4], 0
    // Predicated region
    $region2: #{tpu_custom_call.1} parent=1 // pred_check
      _
    $region3: #{tpu_custom_call.1} parent=1 // pred_check_branch
      %9 = sbr.rel (0) target = $region5
    $region4: #{tpu_custom_call.1} parent=1 // pred_region
      %s11 = ssub.s32 256, 256
      %12 = vsyncadd [#allocation3], %s11
      %s14 = sshll.u32 [#allocation2], 4
      %s15 = int_to_ptr.vmem [resolvable:$true] %s14
      %17 = dma.hbm_to_vmem [thread:$0]  %s0, 256, %s15, [#allocation3]
    $region5: #{tpu_custom_call.1} parent=1 // pred_fallthru
      _
    // Predicated region
    $region6: #{tpu_custom_call.1} parent=1 // pred_check
      _
    $region7: #{tpu_custom_call.1} parent=1 // pred_check_branch
      %19 = sbr.rel (0) target = $region9
    $region8: #{tpu_custom_call.1} parent=1 // pred_region
      %20 = dma.done [#allocation3], 256
    $region9: #{tpu_custom_call.1} parent=1 // pred_fallthru
      _
    %v21 = vld [vmem:[#allocation2] sm:$0xff]
    %v22 = vld [vmem:[#allocation2 + $0x8] sm:$0xff]
    %v23 = vand.u32 2147483647, %v21
    %v24 = vand.u32 2147483647, %v22
    %v25 = vsub.f32 0.0, %v23
    %v26 = vsub.f32 0.0, %v24
    %v27 = vmul.f32 %v25, 1.442695
    %v28 = vpow.pop %v27
    %v29 = vmul.f32 %v26, 1.442695
    %v30 = vpow.pop %v29
    %vm31 = vcmp.ge.f32.partialorder %v21, 0.0
    %vm32 = vcmp.ge.f32.partialorder %v22, 0.0
    %v33 = vsel %vm31, 1.0, %v28
    %v34 = vsel %vm32, 1.0, %v30
    %v35 = vadd.f32 %v28, 1.0
    %v36 = vadd.f32 %v30, 1.0
    %v37 = vrcp.pop %v35
    %v38 = vmul.f32 %v33, %v37
    %v39 = vrcp.pop %v36
    %v40 = vmul.f32 %v34, %v39
    %41 = vst [vmem:[#allocation5] sm:$0xff] %v38
    %42 = vst [vmem:[#allocation5 + $0x8] sm:$0xff] %v40
    // Predicated region
    $region10: #{tpu_custom_call.1} parent=1 // pred_check
      _
    $region11: #{tpu_custom_call.1} parent=1 // pred_check_branch
      %44 = sbr.rel (0) target = $region13
    $region12: #{tpu_custom_call.1} parent=1 // pred_region
      %s46 = ssub.s32 256, 256
      %47 = vsyncadd [#allocation4], %s46
      %s49 = sshll.u32 [#allocation5], 4
      %s50 = int_to_ptr.vmem [resolvable:$true] %s49
      %52 = dma.vmem_to_hbm [thread:$0]  %s50, 256, %s1, [#allocation4]
    $region13: #{tpu_custom_call.1} parent=1 // pred_fallthru
      _
    // Predicated region
    $region14: #{tpu_custom_call.1} parent=1 // pred_check
      _
    $region15: #{tpu_custom_call.1} parent=1 // pred_check_branch
      %54 = sbr.rel (0) target = $region17
    $region16: #{tpu_custom_call.1} parent=1 // pred_region
      %55 = dma.done [#allocation4], 256
    $region17: #{tpu_custom_call.1} parent=1 // pred_fallthru
      _
    %56 = vsyncpa [#allocation3], 1
    %57 = vsyncpa [#allocation4], 1

</llo_original>
